<compile_context>
chip_gen: v6e
topology: v6e:2x2x1
jax: 0.10.0
libtpu: 0.0.40
codegen_flags: <defaults>
</compile_context>

<pallas_src>
import jax
import jax.numpy as jnp
from jax.experimental import pallas as pl
from jax.experimental.pallas import tpu as pltpu

NUM_OUT = 5        # real output width of fc[2]
OUT_PAD = 128      # lane-dense padded output width


def _round_up(x, m):
    return (x + m - 1) // m * m


def ensemble_kernel(
    x1_ref, x2_ref,
    wb_ref, bb_ref,            # modelB linear (16->32)
    wc_ref, bc_ref,            # modelC linear (32->128)
    wa_ref, ba_ref,            # modelA linear (16->8, cols 5..7 zero)
    w0a_ref, w0b_ref, b0_ref,  # fc[0] split (128|8 -> 128), BN0 folded
    w1_ref, b1_ref,            # fc[1] (128->64), BN1 folded
    w2_ref, b2_ref,            # fc[2] (64->128 padded)
    out_ref,
):
    f32 = jnp.float32
    bf16 = jnp.bfloat16

    x1 = x1_ref[...].astype(bf16)
    x2 = x2_ref[...].astype(bf16)

    # ---- sub-model feature extractors -------------------------------------
    h1 = jnp.dot(x1, wb_ref[...], preferred_element_type=f32) + bb_ref[...]
    h1 = jnp.maximum(h1, 0.0)                                   # modelB -> (TB, 32)
    f1 = jnp.dot(h1.astype(bf16), wc_ref[...], preferred_element_type=f32) + bc_ref[...]
    f1 = jnp.maximum(f1, 0.0)                                   # modelC -> (TB, 128)
    f2 = jnp.dot(x2, wa_ref[...], preferred_element_type=f32) + ba_ref[...]
    f2 = jnp.maximum(f2, 0.0)                                   # modelA -> (TB, 8)

    # ---- head fc[0] (133->128), concat fused via split weight, BN folded ---
    z0 = (jnp.dot(f1.astype(bf16), w0a_ref[...], preferred_element_type=f32)
          + jnp.dot(f2.astype(bf16), w0b_ref[...], preferred_element_type=f32)
          + b0_ref[...])
    h = jnp.maximum(z0, 0.0)                                    # relu (dropout = identity)

    # ---- head fc[1] (128->64), BN folded ------------------------------------
    z1 = jnp.dot(h.astype(bf16), w1_ref[...], preferred_element_type=f32) + b1_ref[...]
    h = jnp.maximum(z1, 0.0)

    # ---- head fc[2] (64->5, padded to 128 lanes) + sigmoid ------------------
    z2 = jnp.dot(h.astype(bf16), w2_ref[...], preferred_element_type=f32) + b2_ref[...]
    out_ref[...] = jax.nn.sigmoid(z2)


def my_ensemble_forward(x1, x2, kparams, *, tb=256):
    """x1: (B, 16), x2: (B, 16) float32 -> (B, 5) float32 (sigmoid probs)."""
    B, D1 = x1.shape
    _, D2 = x2.shape

    # Batch tile: up to `tb` rows, sublane-aligned; pad B up to a tile multiple.
    TB = min(tb, _round_up(B, 8))
    Bp = _round_up(B, TB)
    if Bp != B:
        x1 = jnp.pad(x1, ((0, Bp - B), (0, 0)))
        x2 = jnp.pad(x2, ((0, Bp - B), (0, 0)))
    grid = (Bp // TB,)

    weights = (
        kparams["wb"], kparams["bb"],
        kparams["wc"], kparams["bc"],
        kparams["wa"], kparams["ba"],
        kparams["w0a"], kparams["w0b"], kparams["b0"],
        kparams["w1"], kparams["b1"],
        kparams["w2"], kparams["b2"],
    )

    def act_spec(feat):
        return pl.BlockSpec((TB, feat), lambda i: (i, 0))

    def const_spec(arr):
        # Full-array block, same block every grid step -> fetched once, resident.
        return pl.BlockSpec(arr.shape, lambda i: (0, 0))

    in_specs = [act_spec(D1), act_spec(D2)] + [const_spec(w) for w in weights]

    out = pl.pallas_call(
        ensemble_kernel,
        out_shape=jax.ShapeDtypeStruct((Bp, OUT_PAD), jnp.float32),
        grid=grid,
        in_specs=in_specs,
        out_specs=pl.BlockSpec((TB, OUT_PAD), lambda i: (i, 0)),
        compiler_params=pltpu.CompilerParams(
            dimension_semantics=("parallel",),
        ),
    )(x1, x2, *weights)

    return out[:B, :NUM_OUT]


# ----------------------------------------------------------------------------
# Parameter construction (synthetic, deterministic) + BN folding / padding.
# ----------------------------------------------------------------------------
def _linear_params(key, fan_in, fan_out, scale=0.1):
    kw, kb = jax.random.split(key)
    # weight stored transposed vs torch: (in_features, out_features)
    w = scale * jax.random.normal(kw, (fan_in, fan_out), jnp.float32)
    b = scale * jax.random.normal(kb, (1, fan_out), jnp.float32)
    return w, b


def make_params(key):
    """Float32 reference parameters ((in,out) weight layout, raw BN stats)."""
    keys = jax.random.split(key, 8)
    p = {}
    p["wb"], p["bb"] = _linear_params(keys[0], 16, 32)     # modelB
    p["wc"], p["bc"] = _linear_params(keys[1], 32, 128)    # modelC
    p["wa"], p["ba"] = _linear_params(keys[2], 16, 5)      # modelA
    p["w0"], p["b0"] = _linear_params(keys[3], 133, 128)   # fc[0]
    p["w1"], p["b1"] = _linear_params(keys[4], 128, 64)    # fc[1]
    p["w2"], p["b2"] = _linear_params(keys[5], 64, 5)      # fc[2]
    for idx, (kk, n) in enumerate(((keys[6], 128), (keys[7], 64))):
        kg, kb2, km, kv = jax.random.split(kk, 4)
        p[f"gamma{idx}"] = 1.0 + 0.05 * jax.random.normal(kg, (1, n), jnp.float32)
        p[f"beta{idx}"] = 0.05 * jax.random.normal(kb2, (1, n), jnp.float32)
        p[f"rmean{idx}"] = 0.05 * jax.random.normal(km, (1, n), jnp.float32)
        p[f"rvar{idx}"] = 1.0 + 0.05 * jax.random.uniform(kv, (1, n), jnp.float32)
    return p


def prepare_kernel_params(p, eps=1e-5):
    """Fold eval-mode BatchNorm into weights, pad for lane density, cast the
    MXU operands to bf16 (f32 accumulation happens inside the kernel)."""
    bf16 = jnp.bfloat16
    s0 = p["gamma0"] / jnp.sqrt(p["rvar0"] + eps)
    t0 = p["beta0"] - p["rmean0"] * s0
    s1 = p["gamma1"] / jnp.sqrt(p["rvar1"] + eps)
    t1 = p["beta1"] - p["rmean1"] * s1

    kp = {}
    kp["wb"] = p["wb"].astype(bf16)
    kp["bb"] = p["bb"]
    kp["wc"] = p["wc"].astype(bf16)
    kp["bc"] = p["bc"]
    # modelA output padded 5 -> 8 (zero cols) so fc[0]'s split contraction is K=8.
    kp["wa"] = jnp.pad(p["wa"], ((0, 0), (0, 3))).astype(bf16)
    kp["ba"] = jnp.pad(p["ba"], ((0, 0), (0, 3)))
    # fc[0]: cat order is (modelC 128 | modelA 5); split rows 0:128 / 128:133, fold BN0.
    w0 = p["w0"] * s0
    kp["w0a"] = w0[:128, :].astype(bf16)
    kp["w0b"] = jnp.pad(w0[128:, :], ((0, 3), (0, 0))).astype(bf16)   # (8, 128)
    kp["b0"] = p["b0"] * s0 + t0
    # fc[1] with BN1 folded.
    kp["w1"] = (p["w1"] * s1).astype(bf16)
    kp["b1"] = p["b1"] * s1 + t1
    # fc[2] padded to 128 lane-dense output columns.
    kp["w2"] = jnp.pad(p["w2"], ((0, 0), (0, OUT_PAD - NUM_OUT))).astype(bf16)
    kp["b2"] = jnp.pad(p["b2"], ((0, 0), (0, OUT_PAD - NUM_OUT)))
    return kp


def reference_forward(x1, x2, p, eps=1e-5):
    """Pure-JAX f32 reference matching the PyTorch eval-mode forward."""
    s0 = p["gamma0"] / jnp.sqrt(p["rvar0"] + eps)
    t0 = p["beta0"] - p["rmean0"] * s0
    s1 = p["gamma1"] / jnp.sqrt(p["rvar1"] + eps)
    t1 = p["beta1"] - p["rmean1"] * s1
    h1 = jax.nn.relu(x1 @ p["wb"] + p["bb"])
    f1 = jax.nn.relu(h1 @ p["wc"] + p["bc"])
    f2 = jax.nn.relu(x2 @ p["wa"] + p["ba"])
    x = jnp.concatenate([f1, f2], axis=1)
    x = jax.nn.relu((x @ p["w0"] + p["b0"]) * s0 + t0)
    x = jax.nn.relu((x @ p["w1"] + p["b1"]) * s1 + t1)
    return jax.nn.sigmoid(x @ p["w2"] + p["b2"])


if __name__ == "__main__":
    key = jax.random.PRNGKey(0)
    kparam_key, k1, k2 = jax.random.split(key, 3)
    params = make_params(kparam_key)
    kparams = prepare_kernel_params(params)

    batch = 8
    x1 = jax.random.normal(k1, (batch, 16), jnp.float32)   # input to modelB -> modelC
    x2 = jax.random.normal(k2, (batch, 16), jnp.float32)   # input to modelA

    out = my_ensemble_forward(x1, x2, kparams)
    out = jax.block_until_ready(out)

    ref = reference_forward(x1, x2, params)

    assert out.shape == (batch, NUM_OUT), out.shape
    assert bool(jnp.all(jnp.isfinite(out)))
    assert bool(jnp.all((out >= 0.0) & (out <= 1.0)))          # sigmoid range
    assert bool(jnp.allclose(out, ref, atol=5e-2)), float(jnp.max(jnp.abs(out - ref)))
    print("KERNEL_OK")
</pallas_src>

<mosaic_0001>
module attributes {stable_mosaic.version = 11 : i64} {
  func.func @ensemble_kernel(%arg0: i32, %arg1: memref<8x16xf32, #tpu.memory_space<vmem>>, %arg2: memref<8x16xf32, #tpu.memory_space<vmem>>, %arg3: memref<16x32xbf16, #tpu.memory_space<vmem>>, %arg4: memref<1x32xf32, #tpu.memory_space<vmem>>, %arg5: memref<32x128xbf16, #tpu.memory_space<vmem>>, %arg6: memref<1x128xf32, #tpu.memory_space<vmem>>, %arg7: memref<16x8xbf16, #tpu.memory_space<vmem>>, %arg8: memref<1x8xf32, #tpu.memory_space<vmem>>, %arg9: memref<128x128xbf16, #tpu.memory_space<vmem>>, %arg10: memref<8x128xbf16, #tpu.memory_space<vmem>>, %arg11: memref<1x128xf32, #tpu.memory_space<vmem>>, %arg12: memref<128x64xbf16, #tpu.memory_space<vmem>>, %arg13: memref<1x64xf32, #tpu.memory_space<vmem>>, %arg14: memref<64x128xbf16, #tpu.memory_space<vmem>>, %arg15: memref<1x128xf32, #tpu.memory_space<vmem>>, %arg16: memref<8x128xf32, #tpu.memory_space<vmem>>) attributes {dimension_semantics = [#tpu.dimension_semantics<parallel>], iteration_bounds = array<i64: 1>, scalar_prefetch = 0 : i64, scratch_operands = 0 : i64, tpu.core_type = #tpu.core_type<tc>, window_params = [{transform_indices = @transform_0, window_bounds = array<i64: 8, 16>}, {transform_indices = @transform_1, window_bounds = array<i64: 8, 16>}, {pipeline_mode = #tpu.pipeline_mode<synchronous>, transform_indices = @transform_2, window_bounds = array<i64: 16, 32>}, {pipeline_mode = #tpu.pipeline_mode<synchronous>, transform_indices = @transform_3, window_bounds = array<i64: 1, 32>}, {pipeline_mode = #tpu.pipeline_mode<synchronous>, transform_indices = @transform_4, window_bounds = array<i64: 32, 128>}, {pipeline_mode = #tpu.pipeline_mode<synchronous>, transform_indices = @transform_5, window_bounds = array<i64: 1, 128>}, {pipeline_mode = #tpu.pipeline_mode<synchronous>, transform_indices = @transform_6, window_bounds = array<i64: 16, 8>}, {pipeline_mode = #tpu.pipeline_mode<synchronous>, transform_indices = @transform_7, window_bounds = array<i64: 1, 8>}, {pipeline_mode = #tpu.pipeline_mode<synchronous>, transform_indices = @transform_8, window_bounds = array<i64: 128, 128>}, {pipeline_mode = #tpu.pipeline_mode<synchronous>, transform_indices = @transform_9, window_bounds = array<i64: 8, 128>}, {pipeline_mode = #tpu.pipeline_mode<synchronous>, transform_indices = @transform_10, window_bounds = array<i64: 1, 128>}, {pipeline_mode = #tpu.pipeline_mode<synchronous>, transform_indices = @transform_11, window_bounds = array<i64: 128, 64>}, {pipeline_mode = #tpu.pipeline_mode<synchronous>, transform_indices = @transform_12, window_bounds = array<i64: 1, 64>}, {pipeline_mode = #tpu.pipeline_mode<synchronous>, transform_indices = @transform_13, window_bounds = array<i64: 64, 128>}, {pipeline_mode = #tpu.pipeline_mode<synchronous>, transform_indices = @transform_14, window_bounds = array<i64: 1, 128>}, {transform_indices = @transform_15, window_bounds = array<i64: 8, 128>}]} {
    %c0 = arith.constant 0 : index
    %c0_0 = arith.constant 0 : index
    %0 = vector.load %arg1[%c0, %c0_0] : memref<8x16xf32, #tpu.memory_space<vmem>>, vector<8x16xf32>
    %1 = arith.truncf %0 : vector<8x16xf32> to vector<8x16xbf16>
    %c0_1 = arith.constant 0 : index
    %c0_2 = arith.constant 0 : index
    %2 = vector.load %arg2[%c0_1, %c0_2] : memref<8x16xf32, #tpu.memory_space<vmem>>, vector<8x16xf32>
    %3 = arith.truncf %2 : vector<8x16xf32> to vector<8x16xbf16>
    %c0_3 = arith.constant 0 : index
    %c0_4 = arith.constant 0 : index
    %4 = vector.load %arg3[%c0_3, %c0_4] : memref<16x32xbf16, #tpu.memory_space<vmem>>, vector<16x32xbf16>
    %cst = arith.constant dense<0.000000e+00> : vector<8x32xf32>
    %5 = tpu.matmul %1, %4, %cst {dimension_numbers = #tpu.dot_dimension_numbers<[1], [0], [0], [1], [0, 0, 1, 1], [], []>} : vector<8x16xbf16>, vector<16x32xbf16>, vector<8x32xf32> -> vector<8x32xf32>
    %c0_5 = arith.constant 0 : index
    %c0_6 = arith.constant 0 : index
    %6 = vector.load %arg4[%c0_5, %c0_6] : memref<1x32xf32, #tpu.memory_space<vmem>>, vector<1x32xf32>
    %7 = vector.broadcast %6 : vector<1x32xf32> to vector<8x32xf32>
    %8 = arith.addf %5, %7 : vector<8x32xf32>
    %cst_7 = arith.constant 0.000000e+00 : f32
    %9 = vector.broadcast %cst_7 : f32 to vector<8x32xf32>
    %10 = arith.maximumf %8, %9 : vector<8x32xf32>
    %11 = arith.truncf %10 : vector<8x32xf32> to vector<8x32xbf16>
    %c0_8 = arith.constant 0 : index
    %c0_9 = arith.constant 0 : index
    %12 = vector.load %arg5[%c0_8, %c0_9] : memref<32x128xbf16, #tpu.memory_space<vmem>>, vector<32x128xbf16>
    %cst_10 = arith.constant dense<0.000000e+00> : vector<8x128xf32>
    %13 = tpu.matmul %11, %12, %cst_10 {dimension_numbers = #tpu.dot_dimension_numbers<[1], [0], [0], [1], [0, 0, 1, 1], [], []>} : vector<8x32xbf16>, vector<32x128xbf16>, vector<8x128xf32> -> vector<8x128xf32>
    %c0_11 = arith.constant 0 : index
    %c0_12 = arith.constant 0 : index
    %14 = vector.load %arg6[%c0_11, %c0_12] : memref<1x128xf32, #tpu.memory_space<vmem>>, vector<1x128xf32>
    %15 = vector.broadcast %14 : vector<1x128xf32> to vector<8x128xf32>
    %16 = arith.addf %13, %15 : vector<8x128xf32>
    %cst_13 = arith.constant 0.000000e+00 : f32
    %17 = vector.broadcast %cst_13 : f32 to vector<8x128xf32>
    %18 = arith.maximumf %16, %17 : vector<8x128xf32>
    %c0_14 = arith.constant 0 : index
    %c0_15 = arith.constant 0 : index
    %19 = vector.load %arg7[%c0_14, %c0_15] : memref<16x8xbf16, #tpu.memory_space<vmem>>, vector<16x8xbf16>
    %cst_16 = arith.constant dense<0.000000e+00> : vector<8x8xf32>
    %20 = tpu.matmul %3, %19, %cst_16 {dimension_numbers = #tpu.dot_dimension_numbers<[1], [0], [0], [1], [0, 0, 1, 1], [], []>} : vector<8x16xbf16>, vector<16x8xbf16>, vector<8x8xf32> -> vector<8x8xf32>
    %c0_17 = arith.constant 0 : index
    %c0_18 = arith.constant 0 : index
    %21 = vector.load %arg8[%c0_17, %c0_18] : memref<1x8xf32, #tpu.memory_space<vmem>>, vector<1x8xf32>
    %22 = vector.broadcast %21 : vector<1x8xf32> to vector<8x8xf32>
    %23 = arith.addf %20, %22 : vector<8x8xf32>
    %cst_19 = arith.constant 0.000000e+00 : f32
    %24 = vector.broadcast %cst_19 : f32 to vector<8x8xf32>
    %25 = arith.maximumf %23, %24 : vector<8x8xf32>
    %26 = arith.truncf %18 : vector<8x128xf32> to vector<8x128xbf16>
    %c0_20 = arith.constant 0 : index
    %c0_21 = arith.constant 0 : index
    %27 = vector.load %arg9[%c0_20, %c0_21] : memref<128x128xbf16, #tpu.memory_space<vmem>>, vector<128x128xbf16>
    %cst_22 = arith.constant dense<0.000000e+00> : vector<8x128xf32>
    %28 = tpu.matmul %26, %27, %cst_22 {dimension_numbers = #tpu.dot_dimension_numbers<[1], [0], [0], [1], [0, 0, 1, 1], [], []>} : vector<8x128xbf16>, vector<128x128xbf16>, vector<8x128xf32> -> vector<8x128xf32>
    %29 = arith.truncf %25 : vector<8x8xf32> to vector<8x8xbf16>
    %c0_23 = arith.constant 0 : index
    %c0_24 = arith.constant 0 : index
    %30 = vector.load %arg10[%c0_23, %c0_24] : memref<8x128xbf16, #tpu.memory_space<vmem>>, vector<8x128xbf16>
    %cst_25 = arith.constant dense<0.000000e+00> : vector<8x128xf32>
    %31 = tpu.matmul %29, %30, %cst_25 {dimension_numbers = #tpu.dot_dimension_numbers<[1], [0], [0], [1], [0, 0, 1, 1], [], []>} : vector<8x8xbf16>, vector<8x128xbf16>, vector<8x128xf32> -> vector<8x128xf32>
    %32 = arith.addf %28, %31 : vector<8x128xf32>
    %c0_26 = arith.constant 0 : index
    %c0_27 = arith.constant 0 : index
    %33 = vector.load %arg11[%c0_26, %c0_27] : memref<1x128xf32, #tpu.memory_space<vmem>>, vector<1x128xf32>
    %34 = vector.broadcast %33 : vector<1x128xf32> to vector<8x128xf32>
    %35 = arith.addf %32, %34 : vector<8x128xf32>
    %cst_28 = arith.constant 0.000000e+00 : f32
    %36 = vector.broadcast %cst_28 : f32 to vector<8x128xf32>
    %37 = arith.maximumf %35, %36 : vector<8x128xf32>
    %38 = arith.truncf %37 : vector<8x128xf32> to vector<8x128xbf16>
    %c0_29 = arith.constant 0 : index
    %c0_30 = arith.constant 0 : index
    %39 = vector.load %arg12[%c0_29, %c0_30] : memref<128x64xbf16, #tpu.memory_space<vmem>>, vector<128x64xbf16>
    %cst_31 = arith.constant dense<0.000000e+00> : vector<8x64xf32>
    %40 = tpu.matmul %38, %39, %cst_31 {dimension_numbers = #tpu.dot_dimension_numbers<[1], [0], [0], [1], [0, 0, 1, 1], [], []>} : vector<8x128xbf16>, vector<128x64xbf16>, vector<8x64xf32> -> vector<8x64xf32>
    %c0_32 = arith.constant 0 : index
    %c0_33 = arith.constant 0 : index
    %41 = vector.load %arg13[%c0_32, %c0_33] : memref<1x64xf32, #tpu.memory_space<vmem>>, vector<1x64xf32>
    %42 = vector.broadcast %41 : vector<1x64xf32> to vector<8x64xf32>
    %43 = arith.addf %40, %42 : vector<8x64xf32>
    %cst_34 = arith.constant 0.000000e+00 : f32
    %44 = vector.broadcast %cst_34 : f32 to vector<8x64xf32>
    %45 = arith.maximumf %43, %44 : vector<8x64xf32>
    %46 = arith.truncf %45 : vector<8x64xf32> to vector<8x64xbf16>
    %c0_35 = arith.constant 0 : index
    %c0_36 = arith.constant 0 : index
    %47 = vector.load %arg14[%c0_35, %c0_36] : memref<64x128xbf16, #tpu.memory_space<vmem>>, vector<64x128xbf16>
    %cst_37 = arith.constant dense<0.000000e+00> : vector<8x128xf32>
    %48 = tpu.matmul %46, %47, %cst_37 {dimension_numbers = #tpu.dot_dimension_numbers<[1], [0], [0], [1], [0, 0, 1, 1], [], []>} : vector<8x64xbf16>, vector<64x128xbf16>, vector<8x128xf32> -> vector<8x128xf32>
    %c0_38 = arith.constant 0 : index
    %c0_39 = arith.constant 0 : index
    %49 = vector.load %arg15[%c0_38, %c0_39] : memref<1x128xf32, #tpu.memory_space<vmem>>, vector<1x128xf32>
    %50 = vector.broadcast %49 : vector<1x128xf32> to vector<8x128xf32>
    %51 = arith.addf %48, %50 : vector<8x128xf32>
    %52 = arith.negf %51 : vector<8x128xf32>
    %53 = math.exp %52 : vector<8x128xf32>
    %cst_40 = arith.constant 1.000000e+00 : f32
    %54 = vector.broadcast %cst_40 : f32 to vector<8x128xf32>
    %55 = arith.addf %54, %53 : vector<8x128xf32>
    %56 = arith.divf %54, %55 : vector<8x128xf32>
    %c0_41 = arith.constant 0 : index
    %c0_42 = arith.constant 0 : index
    %57 = vector.load %arg16[%c0_41, %c0_42] : memref<8x128xf32, #tpu.memory_space<vmem>>, vector<8x128xf32>
    tpu.vector_store %arg16[%c0_41, %c0_42], %56 {strides = array<i32>} : memref<8x128xf32, #tpu.memory_space<vmem>>, vector<8x128xf32>,
    return
  }
  func.func @transform_0(%arg0: i32) -> (i32, i32) {
    %c0_i32 = arith.constant 0 : i32
    %c0_i32_0 = arith.constant 0 : i32
    return %arg0, %c0_i32 : i32, i32
  }
  func.func @transform_1(%arg0: i32) -> (i32, i32) {
    %c0_i32 = arith.constant 0 : i32
    %c0_i32_0 = arith.constant 0 : i32
    return %arg0, %c0_i32 : i32, i32
  }
  func.func @transform_2(%arg0: i32) -> (i32, i32) {
    %c0_i32 = arith.constant 0 : i32
    %c0_i32_0 = arith.constant 0 : i32
    %c0_i32_1 = arith.constant 0 : i32
    return %c0_i32, %c0_i32_0 : i32, i32
  }
  func.func @transform_3(%arg0: i32) -> (i32, i32) {
    %c0_i32 = arith.constant 0 : i32
    %c0_i32_0 = arith.constant 0 : i32
    %c0_i32_1 = arith.constant 0 : i32
    return %c0_i32, %c0_i32_0 : i32, i32
  }
  func.func @transform_4(%arg0: i32) -> (i32, i32) {
    %c0_i32 = arith.constant 0 : i32
    %c0_i32_0 = arith.constant 0 : i32
    %c0_i32_1 = arith.constant 0 : i32
    return %c0_i32, %c0_i32_0 : i32, i32
  }
  func.func @transform_5(%arg0: i32) -> (i32, i32) {
    %c0_i32 = arith.constant 0 : i32
    %c0_i32_0 = arith.constant 0 : i32
    %c0_i32_1 = arith.constant 0 : i32
    return %c0_i32, %c0_i32_0 : i32, i32
  }
  func.func @transform_6(%arg0: i32) -> (i32, i32) {
    %c0_i32 = arith.constant 0 : i32
    %c0_i32_0 = arith.constant 0 : i32
    %c0_i32_1 = arith.constant 0 : i32
    return %c0_i32, %c0_i32_0 : i32, i32
  }
  func.func @transform_7(%arg0: i32) -> (i32, i32) {
    %c0_i32 = arith.constant 0 : i32
    %c0_i32_0 = arith.constant 0 : i32
    %c0_i32_1 = arith.constant 0 : i32
    return %c0_i32, %c0_i32_0 : i32, i32
  }
  func.func @transform_8(%arg0: i32) -> (i32, i32) {
    %c0_i32 = arith.constant 0 : i32
    %c0_i32_0 = arith.constant 0 : i32
    %c0_i32_1 = arith.constant 0 : i32
    return %c0_i32, %c0_i32_0 : i32, i32
  }
  func.func @transform_9(%arg0: i32) -> (i32, i32) {
    %c0_i32 = arith.constant 0 : i32
    %c0_i32_0 = arith.constant 0 : i32
    %c0_i32_1 = arith.constant 0 : i32
    return %c0_i32, %c0_i32_0 : i32, i32
  }
  func.func @transform_10(%arg0: i32) -> (i32, i32) {
    %c0_i32 = arith.constant 0 : i32
    %c0_i32_0 = arith.constant 0 : i32
    %c0_i32_1 = arith.constant 0 : i32
    return %c0_i32, %c0_i32_0 : i32, i32
  }
  func.func @transform_11(%arg0: i32) -> (i32, i32) {
    %c0_i32 = arith.constant 0 : i32
    %c0_i32_0 = arith.constant 0 : i32
    %c0_i32_1 = arith.constant 0 : i32
    return %c0_i32, %c0_i32_0 : i32, i32
  }
  func.func @transform_12(%arg0: i32) -> (i32, i32) {
    %c0_i32 = arith.constant 0 : i32
    %c0_i32_0 = arith.constant 0 : i32
    %c0_i32_1 = arith.constant 0 : i32
    return %c0_i32, %c0_i32_0 : i32, i32
  }
  func.func @transform_13(%arg0: i32) -> (i32, i32) {
    %c0_i32 = arith.constant 0 : i32
    %c0_i32_0 = arith.constant 0 : i32
    %c0_i32_1 = arith.constant 0 : i32
    return %c0_i32, %c0_i32_0 : i32, i32
  }
  func.func @transform_14(%arg0: i32) -> (i32, i32) {
    %c0_i32 = arith.constant 0 : i32
    %c0_i32_0 = arith.constant 0 : i32
    %c0_i32_1 = arith.constant 0 : i32
    return %c0_i32, %c0_i32_0 : i32, i32
  }
  func.func @transform_15(%arg0: i32) -> (i32, i32) {
    %c0_i32 = arith.constant 0 : i32
    %c0_i32_0 = arith.constant 0 : i32
    return %arg0, %c0_i32 : i32, i32
  }
}

</mosaic_0001>

<llo_original>
// kernel: tpu_custom_call.1
$region0: #{tpu_custom_call.1}
  #allocation0 [shape = 'u32[]', space=smem, size = 0x4, offset = 0x4, fixed_abs, tag = 'smem constant byte address 0x4 - core index']
  #allocation1 [shape = 'u32[144,128]{1,0:T(1,128)}', space=vmem, size = 0x12000, scoped, tag = 'internal scratch']
  %s0 = inlined_call_operand.hbm [shape: f32[8,16], index: 0, kind: input, shape index: {}]
  %s1 = inlined_call_operand.hbm [shape: f32[8,16], index: 1, kind: input, shape index: {}]
  %s2 = inlined_call_operand.hbm [shape: bf16[16,32], index: 2, kind: input, shape index: {}]
  %s3 = inlined_call_operand.hbm [shape: f32[1,32], index: 3, kind: input, shape index: {}]
  %s4 = inlined_call_operand.hbm [shape: bf16[32,128], index: 4, kind: input, shape index: {}]
  %s5 = inlined_call_operand.hbm [shape: f32[1,128], index: 5, kind: input, shape index: {}]
  %s6 = inlined_call_operand.vmem [shape: bf16[16,8], index: 6, kind: input, shape index: {}]
  %s7 = inlined_call_operand.hbm [shape: f32[1,8], index: 7, kind: input, shape index: {}]
  %s8 = inlined_call_operand.vmem [shape: bf16[128,128], index: 8, kind: input, shape index: {}]
  %s9 = inlined_call_operand.hbm [shape: bf16[8,128], index: 9, kind: input, shape index: {}]
  %s10 = inlined_call_operand.hbm [shape: f32[1,128], index: 10, kind: input, shape index: {}]
  %s11 = inlined_call_operand.vmem [shape: bf16[128,64], index: 11, kind: input, shape index: {}]
  %s12 = inlined_call_operand.vmem [shape: f32[1,64], index: 12, kind: input, shape index: {}]
  %s13 = inlined_call_operand.vmem [shape: bf16[64,128], index: 13, kind: input, shape index: {}]
  %s14 = inlined_call_operand.vmem [shape: f32[1,128], index: 14, kind: input, shape index: {}]
  %s15 = inlined_call_operand.hbm [shape: f32[8,128], index: 15, kind: output, shape index: {}]
  %s16 = sld [smem:[#allocation0]]
  $region106: #{tpu_custom_call.1} parent=0
    _
  %s18 = ssub.s32 1, %s16
  %s19 = scalar_select 0, %s18, %s16
  $region1: #{tpu_custom_call.1} parent=0
    #allocation2 [shape = 'u8[4096]{0}', space=vmem, size = 0x1000, scoped, tag = 'input window, operand 0, single buffered']
    #allocation3 [shape = 's32[1]{0}', space=sflag, size = 0x4, scoped, tag = 'scoped memory for tpu_custom_call.1']
    #allocation4 [shape = 's32[1]{0}', space=sflag, size = 0x4, scoped, tag = 'scoped memory for tpu_custom_call.1']
    #allocation5 [shape = 'u8[4096]{0}', space=vmem, size = 0x1000, scoped, tag = 'input window, operand 1, single buffered']
    #allocation6 [shape = 's32[1]{0}', space=sflag, size = 0x4, scoped, tag = 'scoped memory for tpu_custom_call.1']
    #allocation7 [shape = 'u8[4096]{0}', space=vmem, size = 0x1000, scoped, tag = 'input window, operand 2, single buffered']
    #allocation8 [shape = 'u8[512]{0}', space=vmem, size = 0x400, scoped, tag = 'input window, operand 3, single buffered']
    #allocation9 [shape = 's32[1]{0}', space=sflag, size = 0x4, scoped, tag = 'scoped memory for tpu_custom_call.1']
    #allocation10 [shape = 'u8[8192]{0}', space=vmem, size = 0x2000, scoped, tag = 'input window, operand 4, single buffered']
    #allocation11 [shape = 'u8[512]{0}', space=vmem, size = 0x400, scoped, tag = 'input window, operand 5, single buffered']
    #allocation12 [shape = 's32[1]{0}', space=sflag, size = 0x4, scoped, tag = 'scoped memory for tpu_custom_call.1']
    #allocation13 [shape = 'u8[512]{0}', space=vmem, size = 0x400, scoped, tag = 'input window, operand 7, single buffered']
    #allocation14 [shape = 'u8[2048]{0}', space=vmem, size = 0x800, scoped, tag = 'input window, operand 9, single buffered']
    #allocation15 [shape = 's32[1]{0}', space=sflag, size = 0x4, scoped, tag = 'scoped memory for tpu_custom_call.1']
    #allocation16 [shape = 'u8[512]{0}', space=vmem, size = 0x400, scoped, tag = 'input window, operand 10, single buffered']
    #allocation17 [shape = 'u8[4096]{0}', space=vmem, size = 0x1000, scoped, tag = 'output window, operand 0, single buffered']
    %20 = vsyncpa [#allocation3], 0
    %21 = vsyncpa [#allocation6], 0
    %22 = vsyncpa [#allocation9], 0
    %23 = vsyncpa [#allocation12], 0
    %24 = vsyncpa [#allocation15], 0
    %25 = vsyncpa [#allocation4], 0
    // Predicated region
    $region2: #{tpu_custom_call.1} parent=1 // pred_check
      _
    $region3: #{tpu_custom_call.1} parent=1 // pred_check_branch
      %27 = sbr.rel (0) target = $region5
    $region4: #{tpu_custom_call.1} parent=1 // pred_region
      %s29 = ssub.s32 128, 128
      %30 = vsyncadd [#allocation3], %s29
      %s32 = sshll.u32 [#allocation2], 4
      %s33 = int_to_ptr.vmem [resolvable:$true] %s32
      %35 = dma.hbm_to_vmem [thread:$0]  %s0, 128, %s33, [#allocation3]
    $region5: #{tpu_custom_call.1} parent=1 // pred_fallthru
      _
    // Predicated region
    $region6: #{tpu_custom_call.1} parent=1 // pred_check
      _
    $region7: #{tpu_custom_call.1} parent=1 // pred_check_branch
      %37 = sbr.rel (0) target = $region9
    $region8: #{tpu_custom_call.1} parent=1 // pred_region
      %s39 = ssub.s32 128, 128
      %40 = vsyncadd [#allocation6], %s39
      %s42 = sshll.u32 [#allocation5], 4
      %s43 = int_to_ptr.vmem [resolvable:$true] %s42
      %45 = dma.hbm_to_vmem [thread:$0]  %s1, 128, %s43, [#allocation6]
    $region9: #{tpu_custom_call.1} parent=1 // pred_fallthru
      _
    // Predicated region
    $region10: #{tpu_custom_call.1} parent=1 // pred_check
      _
    $region11: #{tpu_custom_call.1} parent=1 // pred_check_branch
      %47 = sbr.rel (0) target = $region13
    $region12: #{tpu_custom_call.1} parent=1 // pred_region
      %s49 = ssub.s32 128, 128
      %50 = vsyncadd [#allocation6], %s49
      %s51 = sshll.u32 [#allocation7], 4
      %s52 = int_to_ptr.vmem [resolvable:$true] %s51
      %57 = dma.hbm_to_vmem [thread:$0]  %s2, 128, %s52, [#allocation6], 64, 64, 4
    $region13: #{tpu_custom_call.1} parent=1 // pred_fallthru
      _
    // Predicated region
    $region14: #{tpu_custom_call.1} parent=1 // pred_check
      _
    $region15: #{tpu_custom_call.1} parent=1 // pred_check_branch
      %59 = sbr.rel (0) target = $region17
    $region16: #{tpu_custom_call.1} parent=1 // pred_region
      %s61 = ssub.s32 16, 16
      %62 = vsyncadd [#allocation9], %s61
      %s64 = sshll.u32 [#allocation8], 4
      %s65 = int_to_ptr.vmem [resolvable:$true] %s64
      %67 = dma.hbm_to_vmem [thread:$0]  %s3, 16, %s65, [#allocation9]
    $region17: #{tpu_custom_call.1} parent=1 // pred_fallthru
      _
    // Predicated region
    $region18: #{tpu_custom_call.1} parent=1 // pred_check
      _
    $region19: #{tpu_custom_call.1} parent=1 // pred_check_branch
      %69 = sbr.rel (0) target = $region21
    $region20: #{tpu_custom_call.1} parent=1 // pred_region
      %s71 = ssub.s32 256, 256
      %72 = vsyncadd [#allocation9], %s71
      %s73 = sshll.u32 [#allocation10], 4
      %s74 = int_to_ptr.vmem [resolvable:$true] %s73
      %79 = dma.hbm_to_vmem [thread:$0]  %s4, 256, %s74, [#allocation9], 64, 64, 4
    $region21: #{tpu_custom_call.1} parent=1 // pred_fallthru
      _
    // Predicated region
    $region22: #{tpu_custom_call.1} parent=1 // pred_check
      _
    $region23: #{tpu_custom_call.1} parent=1 // pred_check_branch
      %81 = sbr.rel (0) target = $region25
    $region24: #{tpu_custom_call.1} parent=1 // pred_region
      %s83 = ssub.s32 16, 16
      %84 = vsyncadd [#allocation12], %s83
      %s86 = sshll.u32 [#allocation11], 4
      %s87 = int_to_ptr.vmem [resolvable:$true] %s86
      %89 = dma.hbm_to_vmem [thread:$0]  %s5, 16, %s87, [#allocation12]
    $region25: #{tpu_custom_call.1} parent=1 // pred_fallthru
      _
    // Predicated region
    $region26: #{tpu_custom_call.1} parent=1 // pred_check
      _
    $region27: #{tpu_custom_call.1} parent=1 // pred_check_branch
      %91 = sbr.rel (0) target = $region29
    $region28: #{tpu_custom_call.1} parent=1 // pred_region
      _
    $region29: #{tpu_custom_call.1} parent=1 // pred_fallthru
      _
    // Predicated region
    $region30: #{tpu_custom_call.1} parent=1 // pred_check
      _
    $region31: #{tpu_custom_call.1} parent=1 // pred_check_branch
      %93 = sbr.rel (0) target = $region33
    $region32: #{tpu_custom_call.1} parent=1 // pred_region
      %s95 = ssub.s32 16, 16
      %96 = vsyncadd [#allocation12], %s95
      %s98 = sshll.u32 [#allocation13], 4
      %s99 = int_to_ptr.vmem [resolvable:$true] %s98
      %101 = dma.hbm_to_vmem [thread:$0]  %s7, 16, %s99, [#allocation12]
    $region33: #{tpu_custom_call.1} parent=1 // pred_fallthru
      _
    // Predicated region
    $region34: #{tpu_custom_call.1} parent=1 // pred_check
      _
    $region35: #{tpu_custom_call.1} parent=1 // pred_check_branch
      %103 = sbr.rel (0) target = $region37
    $region36: #{tpu_custom_call.1} parent=1 // pred_region
      _
    $region37: #{tpu_custom_call.1} parent=1 // pred_fallthru
      _
    // Predicated region
    $region38: #{tpu_custom_call.1} parent=1 // pred_check
      _
    $region39: #{tpu_custom_call.1} parent=1 // pred_check_branch
      %105 = sbr.rel (0) target = $region41
    $region40: #{tpu_custom_call.1} parent=1 // pred_region
      %s107 = ssub.s32 64, 64
      %108 = vsyncadd [#allocation15], %s107
      %s110 = sshll.u32 [#allocation14], 4
      %s111 = int_to_ptr.vmem [resolvable:$true] %s110
      %113 = dma.hbm_to_vmem [thread:$0]  %s9, 64, %s111, [#allocation15]
    $region41: #{tpu_custom_call.1} parent=1 // pred_fallthru
      _
    // Predicated region
    $region42: #{tpu_custom_call.1} parent=1 // pred_check
      _
    $region43: #{tpu_custom_call.1} parent=1 // pred_check_branch
      %115 = sbr.rel (0) target = $region45
    $region44: #{tpu_custom_call.1} parent=1 // pred_region
      %s117 = ssub.s32 16, 16
      %118 = vsyncadd [#allocation15], %s117
      %s120 = sshll.u32 [#allocation16], 4
      %s121 = int_to_ptr.vmem [resolvable:$true] %s120
      %123 = dma.hbm_to_vmem [thread:$0]  %s10, 16, %s121, [#allocation15]
    $region45: #{tpu_custom_call.1} parent=1 // pred_fallthru
      _
    // Predicated region
    $region46: #{tpu_custom_call.1} parent=1 // pred_check
      _
    $region47: #{tpu_custom_call.1} parent=1 // pred_check_branch
      %125 = sbr.rel (0) target = $region49
    $region48: #{tpu_custom_call.1} parent=1 // pred_region
      _
    $region49: #{tpu_custom_call.1} parent=1 // pred_fallthru
      _
    // Predicated region
    $region50: #{tpu_custom_call.1} parent=1 // pred_check
      _
    $region51: #{tpu_custom_call.1} parent=1 // pred_check_branch
      %127 = sbr.rel (0) target = $region53
    $region52: #{tpu_custom_call.1} parent=1 // pred_region
      _
    $region53: #{tpu_custom_call.1} parent=1 // pred_fallthru
      _
    // Predicated region
    $region54: #{tpu_custom_call.1} parent=1 // pred_check
      _
    $region55: #{tpu_custom_call.1} parent=1 // pred_check_branch
      %129 = sbr.rel (0) target = $region57
    $region56: #{tpu_custom_call.1} parent=1 // pred_region
      _
    $region57: #{tpu_custom_call.1} parent=1 // pred_fallthru
      _
    // Predicated region
    $region58: #{tpu_custom_call.1} parent=1 // pred_check
      _
    $region59: #{tpu_custom_call.1} parent=1 // pred_check_branch
      %131 = sbr.rel (0) target = $region61
    $region60: #{tpu_custom_call.1} parent=1 // pred_region
      _
    $region61: #{tpu_custom_call.1} parent=1 // pred_fallthru
      _
    // Predicated region
    $region62: #{tpu_custom_call.1} parent=1 // pred_check
      _
    $region63: #{tpu_custom_call.1} parent=1 // pred_check_branch
      %133 = sbr.rel (0) target = $region65
    $region64: #{tpu_custom_call.1} parent=1 // pred_region
      %134 = dma.done [#allocation3], 128
    $region65: #{tpu_custom_call.1} parent=1 // pred_fallthru
      _
    // Predicated region
    $region66: #{tpu_custom_call.1} parent=1 // pred_check
      _
    $region67: #{tpu_custom_call.1} parent=1 // pred_check_branch
      %136 = sbr.rel (0) target = $region69
    $region68: #{tpu_custom_call.1} parent=1 // pred_region
      %137 = dma.done [#allocation6], 128
    $region69: #{tpu_custom_call.1} parent=1 // pred_fallthru
      _
    // Predicated region
    $region70: #{tpu_custom_call.1} parent=1 // pred_check
      _
    $region71: #{tpu_custom_call.1} parent=1 // pred_check_branch
      %139 = sbr.rel (0) target = $region73
    $region72: #{tpu_custom_call.1} parent=1 // pred_region
      %140 = dma.done [#allocation6], 128
    $region73: #{tpu_custom_call.1} parent=1 // pred_fallthru
      _
    // Predicated region
    $region74: #{tpu_custom_call.1} parent=1 // pred_check
      _
    $region75: #{tpu_custom_call.1} parent=1 // pred_check_branch
      %142 = sbr.rel (0) target = $region77
    $region76: #{tpu_custom_call.1} parent=1 // pred_region
      %143 = dma.done [#allocation9], 16
    $region77: #{tpu_custom_call.1} parent=1 // pred_fallthru
      _
    // Predicated region
    $region78: #{tpu_custom_call.1} parent=1 // pred_check
      _
    $region79: #{tpu_custom_call.1} parent=1 // pred_check_branch
      %145 = sbr.rel (0) target = $region81
    $region80: #{tpu_custom_call.1} parent=1 // pred_region
      %146 = dma.done [#allocation9], 256
    $region81: #{tpu_custom_call.1} parent=1 // pred_fallthru
      _
    // Predicated region
    $region82: #{tpu_custom_call.1} parent=1 // pred_check
      _
    $region83: #{tpu_custom_call.1} parent=1 // pred_check_branch
      %148 = sbr.rel (0) target = $region85
    $region84: #{tpu_custom_call.1} parent=1 // pred_region
      %149 = dma.done [#allocation12], 16
    $region85: #{tpu_custom_call.1} parent=1 // pred_fallthru
      _
    // Predicated region
    $region86: #{tpu_custom_call.1} parent=1 // pred_check
      _
    $region87: #{tpu_custom_call.1} parent=1 // pred_check_branch
      %151 = sbr.rel (0) target = $region89
    $region88: #{tpu_custom_call.1} parent=1 // pred_region
      %152 = dma.done [#allocation12], 16
    $region89: #{tpu_custom_call.1} parent=1 // pred_fallthru
      _
    // Predicated region
    $region90: #{tpu_custom_call.1} parent=1 // pred_check
      _
    $region91: #{tpu_custom_call.1} parent=1 // pred_check_branch
      %154 = sbr.rel (0) target = $region93
    $region92: #{tpu_custom_call.1} parent=1 // pred_region
      %155 = dma.done [#allocation15], 64
    $region93: #{tpu_custom_call.1} parent=1 // pred_fallthru
      _
    // Predicated region
    $region94: #{tpu_custom_call.1} parent=1 // pred_check
      _
    $region95: #{tpu_custom_call.1} parent=1 // pred_check_branch
      %157 = sbr.rel (0) target = $region97
    $region96: #{tpu_custom_call.1} parent=1 // pred_region
      %158 = dma.done [#allocation15], 16
    $region97: #{tpu_custom_call.1} parent=1 // pred_fallthru
      _
    %v160 = vld [vmem:[#allocation2] sm:$0xff]
    %v161 = vpack.c.bf16 %v160, %v160
    %v162 = vld [vmem:[#allocation5] sm:$0xff]
    %v163 = vpack.c.bf16 %v162, %v162
    %v164 = vld [vmem:[#allocation7] sm:$0xf]
    %v165 = vld [vmem:[#allocation7 + $0x4] sm:$0xf]
    %v166 = vld [vmem:[#allocation8] sm:$0x1]
    %v168 = vlaneseq
    %v169 = vshrl.u32 %v168, 7
    %v170 = vsub.s32 0, %v169
    %v171 = vrot.slane %v166, %v170
    %v175 = vunpack.c.l.b16 %v164
    %v176 = vunpack.c.l.b16 %v165
    %v177 = vpack.c.b16 %v176, %v175
    %vm179 = vcmask 130048
    %v181 = vsel %vm179, %v161, 0
    %183 = vmatprep.subr.bf16.mxu0 0
    %184 = vmatpush1.bf16.msra.mxu0 0
    %185 = vmatprep.subr.bf16.mxu0 0
    %186 = vmatpush1.bf16.msra.mxu0 0
    %187 = vmatprep.subr.bf16.mxu0 0
    %188 = vmatpush1.bf16.msra.mxu0 0
    %189 = vmatprep.subr.bf16.mxu0 0
    %190 = vmatpush1.bf16.msra.mxu0 0
    %191 = vmatprep.subr.bf16.mxu0 0
    %192 = vmatpush1.bf16.msra.mxu0 0
    %193 = vmatprep.subr.bf16.mxu0 0
    %194 = vmatpush1.bf16.msra.mxu0 0
    %195 = vmatprep.subr.bf16.mxu0 0
    %196 = vmatpush1.bf16.msra.mxu0 0
    %197 = vmatprep.subr.bf16.mxu0 0
    %198 = vmatpush1.bf16.msra.mxu0 %v177
    %199 = vmatprep.subr.bf16.mxu0 0
    %200 = vmatpush2.bf16.msra.mxu0 0
    %201 = vmatprep.subr.bf16.mxu0 0
    %202 = vmatpush2.bf16.msra.mxu0 0
    %203 = vmatprep.subr.bf16.mxu0 0
    %204 = vmatpush2.bf16.msra.mxu0 0
    %205 = vmatprep.subr.bf16.mxu0 0
    %206 = vmatpush2.bf16.msra.mxu0 0
    %207 = vmatprep.subr.bf16.mxu0 0
    %208 = vmatpush2.bf16.msra.mxu0 0
    %209 = vmatprep.subr.bf16.mxu0 0
    %210 = vmatpush2.bf16.msra.mxu0 0
    %211 = vmatprep.subr.bf16.mxu0 0
    %212 = vmatpush2.bf16.msra.mxu0 0
    %213 = vmatprep.subr.bf16.mxu0 0
    %214 = vmatpush2.bf16.msra.mxu0 0
    %215 = vmatprep.mubr.bf16.mxu0 0
    %216 = vmatmul.mubr.bf16.gmra.mxu0 %v181
    %v217 = vpop.f32.mrf.mxu0
    %v218 = vadd.f32 %v171, %v217
    %v219 = vpop.f32.mrf.mxu0
    %v220 = vpop.f32.mrf.mxu0
    %v221 = vpop.f32.mrf.mxu0
    %222 = vdwg.mxu0
    %v223 = vmax.f32 %v218, 0.0
    %v224 = vpack.c.bf16 %v223, %v223
    %v225 = vld [vmem:[#allocation10] sm:$0xf]
    %v226 = vld [vmem:[#allocation10 + $0x4] sm:$0xf]
    %v227 = vld [vmem:[#allocation10 + $0x8] sm:$0xf]
    %v228 = vld [vmem:[#allocation10 + $0xc] sm:$0xf]
    %v229 = vld [vmem:[#allocation11] sm:$0x1]
    %v231 = vlaneseq
    %v232 = vshrl.u32 %v231, 7
    %v233 = vsub.s32 0, %v232
    %v234 = vrot.slane %v229, %v233
    %v240 = vunpack.c.l.b16 %v225
    %v241 = vunpack.c.l.b16 %v226
    %v242 = vunpack.c.l.b16 %v227
    %v243 = vunpack.c.l.b16 %v228
    %v244 = vpack.c.b16 %v241, %v240
    %v245 = vpack.c.b16 %v243, %v242
    %vm248 = vcmask 261120
    %v250 = vsel %vm248, %v224, 0
    %252 = vmatprep.subr.bf16.mxu0 0
    %253 = vmatpush1.bf16.msra.mxu0 0
    %254 = vmatprep.subr.bf16.mxu0 0
    %255 = vmatpush1.bf16.msra.mxu0 0
    %256 = vmatprep.subr.bf16.mxu0 0
    %257 = vmatpush1.bf16.msra.mxu0 0
    %258 = vmatprep.subr.bf16.mxu0 0
    %259 = vmatpush1.bf16.msra.mxu0 0
    %260 = vmatprep.subr.bf16.mxu0 0
    %261 = vmatpush1.bf16.msra.mxu0 0
    %262 = vmatprep.subr.bf16.mxu0 0
    %263 = vmatpush1.bf16.msra.mxu0 0
    %264 = vmatprep.subr.bf16.mxu0 0
    %265 = vmatpush1.bf16.msra.mxu0 %v245
    %266 = vmatprep.subr.bf16.mxu0 0
    %267 = vmatpush1.bf16.msra.mxu0 %v244
    %268 = vmatprep.subr.bf16.mxu0 0
    %269 = vmatpush2.bf16.msra.mxu0 0
    %270 = vmatprep.subr.bf16.mxu0 0
    %271 = vmatpush2.bf16.msra.mxu0 0
    %272 = vmatprep.subr.bf16.mxu0 0
    %273 = vmatpush2.bf16.msra.mxu0 0
    %274 = vmatprep.subr.bf16.mxu0 0
    %275 = vmatpush2.bf16.msra.mxu0 0
    %276 = vmatprep.subr.bf16.mxu0 0
    %277 = vmatpush2.bf16.msra.mxu0 0
    %278 = vmatprep.subr.bf16.mxu0 0
    %279 = vmatpush2.bf16.msra.mxu0 0
    %280 = vmatprep.subr.bf16.mxu0 0
    %281 = vmatpush2.bf16.msra.mxu0 0
    %282 = vmatprep.subr.bf16.mxu0 0
    %283 = vmatpush2.bf16.msra.mxu0 0
    %284 = vmatprep.mubr.bf16.mxu0 0
    %285 = vmatmul.mubr.bf16.gmra.mxu0 %v250
    %v286 = vpop.f32.mrf.mxu0
    %v287 = vadd.f32 %v234, %v286
    %v288 = vpop.f32.mrf.mxu0
    %v289 = vpop.f32.mrf.mxu0
    %v290 = vpop.f32.mrf.mxu0
    %291 = vdwg.mxu0
    %v292 = vmax.f32 %v287, 0.0
    %v293 = vld [vmem:[%s6] sm:$0xf]
    %v294 = vld [vmem:[%s6 + $0x4] sm:$0xf]
    %v295 = vld [vmem:[#allocation13] sm:$0x1]
    %v297 = vlaneseq
    %v298 = vshrl.u32 %v297, 7
    %v299 = vsub.s32 0, %v298
    %v300 = vrot.slane %v295, %v299
    %v304 = vunpack.c.l.b16 %v293
    %v305 = vunpack.c.l.b16 %v294
    %v306 = vpack.c.b16 %v305, %v304
    %v309 = vsel %vm179, %v163, 0
    %311 = vmatprep.subr.bf16.mxu0 0
    %312 = vmatpush1.bf16.msra.mxu0 0
    %313 = vmatprep.subr.bf16.mxu0 0
    %314 = vmatpush1.bf16.msra.mxu0 0
    %315 = vmatprep.subr.bf16.mxu0 0
    %316 = vmatpush1.bf16.msra.mxu0 0
    %317 = vmatprep.subr.bf16.mxu0 0
    %318 = vmatpush1.bf16.msra.mxu0 0
    %319 = vmatprep.subr.bf16.mxu0 0
    %320 = vmatpush1.bf16.msra.mxu0 0
    %321 = vmatprep.subr.bf16.mxu0 0
    %322 = vmatpush1.bf16.msra.mxu0 0
    %323 = vmatprep.subr.bf16.mxu0 0
    %324 = vmatpush1.bf16.msra.mxu0 0
    %325 = vmatprep.subr.bf16.mxu0 0
    %326 = vmatpush1.bf16.msra.mxu0 %v306
    %327 = vmatprep.subr.bf16.mxu0 0
    %328 = vmatpush2.bf16.msra.mxu0 0
    %329 = vmatprep.subr.bf16.mxu0 0
    %330 = vmatpush2.bf16.msra.mxu0 0
    %331 = vmatprep.subr.bf16.mxu0 0
    %332 = vmatpush2.bf16.msra.mxu0 0
    %333 = vmatprep.subr.bf16.mxu0 0
    %334 = vmatpush2.bf16.msra.mxu0 0
    %335 = vmatprep.subr.bf16.mxu0 0
    %336 = vmatpush2.bf16.msra.mxu0 0
    %337 = vmatprep.subr.bf16.mxu0 0
    %338 = vmatpush2.bf16.msra.mxu0 0
    %339 = vmatprep.subr.bf16.mxu0 0
    %340 = vmatpush2.bf16.msra.mxu0 0
    %341 = vmatprep.subr.bf16.mxu0 0
    %342 = vmatpush2.bf16.msra.mxu0 0
    %343 = vmatprep.mubr.bf16.mxu0 0
    %344 = vmatmul.mubr.bf16.gmra.mxu0 %v309
    %v345 = vpop.f32.mrf.mxu0
    %v346 = vadd.f32 %v300, %v345
    %v347 = vpop.f32.mrf.mxu0
    %v348 = vpop.f32.mrf.mxu0
    %v349 = vpop.f32.mrf.mxu0
    %350 = vdwg.mxu0
    %v351 = vmax.f32 %v346, 0.0
    %v352 = vpack.c.bf16 %v292, %v292
    %v353 = vld [vmem:[%s8] sm:$0xf]
    %v354 = vld [vmem:[%s8 + $0x4] sm:$0xf]
    %v355 = vld [vmem:[%s8 + $0x8] sm:$0xf]
    %v356 = vld [vmem:[%s8 + $0xc] sm:$0xf]
    %v357 = vld [vmem:[%s8 + $0x10] sm:$0xf]
    %v358 = vld [vmem:[%s8 + $0x14] sm:$0xf]
    %v359 = vld [vmem:[%s8 + $0x18] sm:$0xf]
    %v360 = vld [vmem:[%s8 + $0x1c] sm:$0xf]
    %v361 = vld [vmem:[%s8 + $0x20] sm:$0xf]
    %v362 = vld [vmem:[%s8 + $0x24] sm:$0xf]
    %v363 = vld [vmem:[%s8 + $0x28] sm:$0xf]
    %v364 = vld [vmem:[%s8 + $0x2c] sm:$0xf]
    %v365 = vld [vmem:[%s8 + $0x30] sm:$0xf]
    %v366 = vld [vmem:[%s8 + $0x34] sm:$0xf]
    %v367 = vld [vmem:[%s8 + $0x38] sm:$0xf]
    %v368 = vld [vmem:[%s8 + $0x3c] sm:$0xf]
    %v369 = vpack.c.bf16 %v351, %v351
    %v370 = vld [vmem:[#allocation14] sm:$0xf]
    %vm371 = vcmask 64512
    %v373 = vsel %vm371, %v369, 0
    %vm375 = vcmask 1043456
    %v377 = vsel %vm375, %v370, 0
    %379 = vmatprep.subr.bf16.mxu0 0
    %380 = vmatpush1.bf16.msra.mxu0 0
    %381 = vmatprep.subr.bf16.mxu0 0
    %382 = vmatpush1.bf16.msra.mxu0 0
    %383 = vmatprep.subr.bf16.mxu0 0
    %384 = vmatpush1.bf16.msra.mxu0 0
    %385 = vmatprep.subr.bf16.mxu0 0
    %386 = vmatpush1.bf16.msra.mxu0 0
    %387 = vmatprep.subr.bf16.mxu0 0
    %388 = vmatpush1.bf16.msra.mxu0 0
    %389 = vmatprep.subr.bf16.mxu0 0
    %390 = vmatpush1.bf16.msra.mxu0 0
    %391 = vmatprep.subr.bf16.mxu0 0
    %392 = vmatpush1.bf16.msra.mxu0 0
    %393 = vmatprep.subr.bf16.mxu0 0
    %394 = vmatpush1.bf16.msra.mxu0 %v377
    %395 = vmatprep.subr.bf16.mxu0 0
    %396 = vmatpush2.bf16.msra.mxu0 0
    %397 = vmatprep.subr.bf16.mxu0 0
    %398 = vmatpush2.bf16.msra.mxu0 0
    %399 = vmatprep.subr.bf16.mxu0 0
    %400 = vmatpush2.bf16.msra.mxu0 0
    %401 = vmatprep.subr.bf16.mxu0 0
    %402 = vmatpush2.bf16.msra.mxu0 0
    %403 = vmatprep.subr.bf16.mxu0 0
    %404 = vmatpush2.bf16.msra.mxu0 0
    %405 = vmatprep.subr.bf16.mxu0 0
    %406 = vmatpush2.bf16.msra.mxu0 0
    %407 = vmatprep.subr.bf16.mxu0 0
    %408 = vmatpush2.bf16.msra.mxu0 0
    %409 = vmatprep.subr.bf16.mxu0 0
    %410 = vmatpush2.bf16.msra.mxu0 0
    %411 = vmatprep.mubr.bf16.mxu0 0
    %412 = vmatmul.mubr.bf16.gmra.mxu0 %v373
    %v413 = vpop.f32.mrf.mxu0
    %v414 = vadd.f32 0.0, %v413
    %v415 = vpop.f32.mrf.mxu0
    %v416 = vpop.f32.mrf.mxu0
    %v417 = vpop.f32.mrf.mxu0
    %418 = vdwg.mxu0
    %v435 = vunpack.c.l.b16 %v353
    %v436 = vunpack.c.l.b16 %v354
    %v437 = vunpack.c.l.b16 %v355
    %v438 = vunpack.c.l.b16 %v356
    %v439 = vunpack.c.l.b16 %v357
    %v440 = vunpack.c.l.b16 %v358
    %v441 = vunpack.c.l.b16 %v359
    %v442 = vunpack.c.l.b16 %v360
    %v443 = vunpack.c.l.b16 %v361
    %v444 = vunpack.c.l.b16 %v362
    %v445 = vunpack.c.l.b16 %v363
    %v446 = vunpack.c.l.b16 %v364
    %v447 = vunpack.c.l.b16 %v365
    %v448 = vunpack.c.l.b16 %v366
    %v449 = vunpack.c.l.b16 %v367
    %v450 = vunpack.c.l.b16 %v368
    %v451 = vpack.c.b16 %v436, %v435
    %v452 = vpack.c.b16 %v438, %v437
    %v453 = vpack.c.b16 %v440, %v439
    %v454 = vpack.c.b16 %v442, %v441
    %v455 = vpack.c.b16 %v444, %v443
    %v456 = vpack.c.b16 %v446, %v445
    %v457 = vpack.c.b16 %v448, %v447
    %v458 = vpack.c.b16 %v450, %v449
    %467 = vmatprep.subr.bf16.mxu0 0
    %468 = vmatpush1.bf16.msra.mxu0 %v458
    %469 = vmatprep.subr.bf16.mxu0 0
    %470 = vmatpush1.bf16.msra.mxu0 %v457
    %471 = vmatprep.subr.bf16.mxu0 0
    %472 = vmatpush1.bf16.msra.mxu0 %v456
    %473 = vmatprep.subr.bf16.mxu0 0
    %474 = vmatpush1.bf16.msra.mxu0 %v455
    %475 = vmatprep.subr.bf16.mxu0 0
    %476 = vmatpush1.bf16.msra.mxu0 %v454
    %477 = vmatprep.subr.bf16.mxu0 0
    %478 = vmatpush1.bf16.msra.mxu0 %v453
    %479 = vmatprep.subr.bf16.mxu0 0
    %480 = vmatpush1.bf16.msra.mxu0 %v452
    %481 = vmatprep.subr.bf16.mxu0 0
    %482 = vmatpush1.bf16.msra.mxu0 %v451
    %483 = vmatprep.subr.bf16.mxu0 0
    %484 = vmatpush2.bf16.msra.mxu0 0
    %485 = vmatprep.subr.bf16.mxu0 0
    %486 = vmatpush2.bf16.msra.mxu0 0
    %487 = vmatprep.subr.bf16.mxu0 0
    %488 = vmatpush2.bf16.msra.mxu0 0
    %489 = vmatprep.subr.bf16.mxu0 0
    %490 = vmatpush2.bf16.msra.mxu0 0
    %491 = vmatprep.subr.bf16.mxu0 0
    %492 = vmatpush2.bf16.msra.mxu0 0
    %493 = vmatprep.subr.bf16.mxu0 0
    %494 = vmatpush2.bf16.msra.mxu0 0
    %495 = vmatprep.subr.bf16.mxu0 0
    %496 = vmatpush2.bf16.msra.mxu0 0
    %497 = vmatprep.subr.bf16.mxu0 0
    %498 = vmatpush2.bf16.msra.mxu0 0
    %499 = vmatprep.mubr.bf16.mxu0 0
    %500 = vmatmul.mubr.bf16.gmra.mxu0 %v352
    %v501 = vpop.f32.mrf.mxu0
    %v502 = vadd.f32 %v414, %v501
    %v503 = vpop.f32.mrf.mxu0
    %v504 = vpop.f32.mrf.mxu0
    %v505 = vpop.f32.mrf.mxu0
    %506 = vdwg.mxu0
    %v507 = vld [vmem:[#allocation16] sm:$0x1]
    %v509 = vlaneseq
    %v510 = vshrl.u32 %v509, 7
    %v511 = vsub.s32 0, %v510
    %v512 = vrot.slane %v507, %v511
    %v514 = vadd.f32 %v502, %v512
    %v515 = vmax.f32 %v514, 0.0
    %v516 = vpack.c.bf16 %v515, %v515
    %v517 = vld [vmem:[%s11] sm:$0xf]
    %v518 = vld [vmem:[%s11 + $0x4] sm:$0xf]
    %v519 = vld [vmem:[%s11 + $0x8] sm:$0xf]
    %v520 = vld [vmem:[%s11 + $0xc] sm:$0xf]
    %v521 = vld [vmem:[%s11 + $0x10] sm:$0xf]
    %v522 = vld [vmem:[%s11 + $0x14] sm:$0xf]
    %v523 = vld [vmem:[%s11 + $0x18] sm:$0xf]
    %v524 = vld [vmem:[%s11 + $0x1c] sm:$0xf]
    %v525 = vld [vmem:[%s11 + $0x20] sm:$0xf]
    %v526 = vld [vmem:[%s11 + $0x24] sm:$0xf]
    %v527 = vld [vmem:[%s11 + $0x28] sm:$0xf]
    %v528 = vld [vmem:[%s11 + $0x2c] sm:$0xf]
    %v529 = vld [vmem:[%s11 + $0x30] sm:$0xf]
    %v530 = vld [vmem:[%s11 + $0x34] sm:$0xf]
    %v531 = vld [vmem:[%s11 + $0x38] sm:$0xf]
    %v532 = vld [vmem:[%s11 + $0x3c] sm:$0xf]
    %v533 = vld [vmem:[%s12] sm:$0x1]
    %v535 = vlaneseq
    %v536 = vshrl.u32 %v535, 7
    %v537 = vsub.s32 0, %v536
    %v538 = vrot.slane %v533, %v537
    %v556 = vunpack.c.l.b16 %v517
    %v557 = vunpack.c.l.b16 %v518
    %v558 = vunpack.c.l.b16 %v519
    %v559 = vunpack.c.l.b16 %v520
    %v560 = vunpack.c.l.b16 %v521
    %v561 = vunpack.c.l.b16 %v522
    %v562 = vunpack.c.l.b16 %v523
    %v563 = vunpack.c.l.b16 %v524
    %v564 = vunpack.c.l.b16 %v525
    %v565 = vunpack.c.l.b16 %v526
    %v566 = vunpack.c.l.b16 %v527
    %v567 = vunpack.c.l.b16 %v528
    %v568 = vunpack.c.l.b16 %v529
    %v569 = vunpack.c.l.b16 %v530
    %v570 = vunpack.c.l.b16 %v531
    %v571 = vunpack.c.l.b16 %v532
    %v572 = vpack.c.b16 %v557, %v556
    %v573 = vpack.c.b16 %v559, %v558
    %v574 = vpack.c.b16 %v561, %v560
    %v575 = vpack.c.b16 %v563, %v562
    %v576 = vpack.c.b16 %v565, %v564
    %v577 = vpack.c.b16 %v567, %v566
    %v578 = vpack.c.b16 %v569, %v568
    %v579 = vpack.c.b16 %v571, %v570
    %588 = vmatprep.subr.bf16.mxu0 0
    %589 = vmatpush1.bf16.msra.mxu0 %v579
    %590 = vmatprep.subr.bf16.mxu0 0
    %591 = vmatpush1.bf16.msra.mxu0 %v578
    %592 = vmatprep.subr.bf16.mxu0 0
    %593 = vmatpush1.bf16.msra.mxu0 %v577
    %594 = vmatprep.subr.bf16.mxu0 0
    %595 = vmatpush1.bf16.msra.mxu0 %v576
    %596 = vmatprep.subr.bf16.mxu0 0
    %597 = vmatpush1.bf16.msra.mxu0 %v575
    %598 = vmatprep.subr.bf16.mxu0 0
    %599 = vmatpush1.bf16.msra.mxu0 %v574
    %600 = vmatprep.subr.bf16.mxu0 0
    %601 = vmatpush1.bf16.msra.mxu0 %v573
    %602 = vmatprep.subr.bf16.mxu0 0
    %603 = vmatpush1.bf16.msra.mxu0 %v572
    %604 = vmatprep.subr.bf16.mxu0 0
    %605 = vmatpush2.bf16.msra.mxu0 0
    %606 = vmatprep.subr.bf16.mxu0 0
    %607 = vmatpush2.bf16.msra.mxu0 0
    %608 = vmatprep.subr.bf16.mxu0 0
    %609 = vmatpush2.bf16.msra.mxu0 0
    %610 = vmatprep.subr.bf16.mxu0 0
    %611 = vmatpush2.bf16.msra.mxu0 0
    %612 = vmatprep.subr.bf16.mxu0 0
    %613 = vmatpush2.bf16.msra.mxu0 0
    %614 = vmatprep.subr.bf16.mxu0 0
    %615 = vmatpush2.bf16.msra.mxu0 0
    %616 = vmatprep.subr.bf16.mxu0 0
    %617 = vmatpush2.bf16.msra.mxu0 0
    %618 = vmatprep.subr.bf16.mxu0 0
    %619 = vmatpush2.bf16.msra.mxu0 0
    %620 = vmatprep.mubr.bf16.mxu0 0
    %621 = vmatmul.mubr.bf16.gmra.mxu0 %v516
    %v622 = vpop.f32.mrf.mxu0
    %v623 = vadd.f32 %v538, %v622
    %v624 = vpop.f32.mrf.mxu0
    %v625 = vpop.f32.mrf.mxu0
    %v626 = vpop.f32.mrf.mxu0
    %627 = vdwg.mxu0
    %v628 = vmax.f32 %v623, 0.0
    %v629 = vpack.c.bf16 %v628, %v628
    %v630 = vld [vmem:[%s13] sm:$0xf]
    %v631 = vld [vmem:[%s13 + $0x4] sm:$0xf]
    %v632 = vld [vmem:[%s13 + $0x8] sm:$0xf]
    %v633 = vld [vmem:[%s13 + $0xc] sm:$0xf]
    %v634 = vld [vmem:[%s13 + $0x10] sm:$0xf]
    %v635 = vld [vmem:[%s13 + $0x14] sm:$0xf]
    %v636 = vld [vmem:[%s13 + $0x18] sm:$0xf]
    %v637 = vld [vmem:[%s13 + $0x1c] sm:$0xf]
    %v638 = vld [vmem:[%s14] sm:$0x1]
    %v640 = vlaneseq
    %v641 = vshrl.u32 %v640, 7
    %v642 = vsub.s32 0, %v641
    %v643 = vrot.slane %v638, %v642
    %v653 = vunpack.c.l.b16 %v630
    %v654 = vunpack.c.l.b16 %v631
    %v655 = vunpack.c.l.b16 %v632
    %v656 = vunpack.c.l.b16 %v633
    %v657 = vunpack.c.l.b16 %v634
    %v658 = vunpack.c.l.b16 %v635
    %v659 = vunpack.c.l.b16 %v636
    %v660 = vunpack.c.l.b16 %v637
    %v661 = vpack.c.b16 %v654, %v653
    %v662 = vpack.c.b16 %v656, %v655
    %v663 = vpack.c.b16 %v658, %v657
    %v664 = vpack.c.b16 %v660, %v659
    %vm669 = vcmask 523264
    %v671 = vsel %vm669, %v629, 0
    %673 = vmatprep.subr.bf16.mxu0 0
    %674 = vmatpush1.bf16.msra.mxu0 0
    %675 = vmatprep.subr.bf16.mxu0 0
    %676 = vmatpush1.bf16.msra.mxu0 0
    %677 = vmatprep.subr.bf16.mxu0 0
    %678 = vmatpush1.bf16.msra.mxu0 0
    %679 = vmatprep.subr.bf16.mxu0 0
    %680 = vmatpush1.bf16.msra.mxu0 0
    %681 = vmatprep.subr.bf16.mxu0 0
    %682 = vmatpush1.bf16.msra.mxu0 %v664
    %683 = vmatprep.subr.bf16.mxu0 0
    %684 = vmatpush1.bf16.msra.mxu0 %v663
    %685 = vmatprep.subr.bf16.mxu0 0
    %686 = vmatpush1.bf16.msra.mxu0 %v662
    %687 = vmatprep.subr.bf16.mxu0 0
    %688 = vmatpush1.bf16.msra.mxu0 %v661
    %689 = vmatprep.subr.bf16.mxu0 0
    %690 = vmatpush2.bf16.msra.mxu0 0
    %691 = vmatprep.subr.bf16.mxu0 0
    %692 = vmatpush2.bf16.msra.mxu0 0
    %693 = vmatprep.subr.bf16.mxu0 0
    %694 = vmatpush2.bf16.msra.mxu0 0
    %695 = vmatprep.subr.bf16.mxu0 0
    %696 = vmatpush2.bf16.msra.mxu0 0
    %697 = vmatprep.subr.bf16.mxu0 0
    %698 = vmatpush2.bf16.msra.mxu0 0
    %699 = vmatprep.subr.bf16.mxu0 0
    %700 = vmatpush2.bf16.msra.mxu0 0
    %701 = vmatprep.subr.bf16.mxu0 0
    %702 = vmatpush2.bf16.msra.mxu0 0
    %703 = vmatprep.subr.bf16.mxu0 0
    %704 = vmatpush2.bf16.msra.mxu0 0
    %705 = vmatprep.mubr.bf16.mxu0 0
    %706 = vmatmul.mubr.bf16.gmra.mxu0 %v671
    %v707 = vpop.f32.mrf.mxu0
    %v708 = vadd.f32 %v643, %v707
    %v709 = vpop.f32.mrf.mxu0
    %v710 = vpop.f32.mrf.mxu0
    %v711 = vpop.f32.mrf.mxu0
    %712 = vdwg.mxu0
    %v713 = vxor.u32 %v708, 2147483648
    %v714 = vmul.f32 %v713, 1.442695
    %v715 = vpow.pop %v714
    %v716 = vadd.f32 %v715, 1.0
    %v717 = vrcp.pop %v716
    %v718 = vmul.f32 1.0, %v717
    %719 = vst [vmem:[#allocation17] sm:$0xff] %v718
    // Predicated region
    $region98: #{tpu_custom_call.1} parent=1 // pred_check
      _
    $region99: #{tpu_custom_call.1} parent=1 // pred_check_branch
      %721 = sbr.rel (0) target = $region101
    $region100: #{tpu_custom_call.1} parent=1 // pred_region
      %s723 = ssub.s32 128, 128
      %724 = vsyncadd [#allocation4], %s723
      %s726 = sshll.u32 [#allocation17], 4
      %s727 = int_to_ptr.vmem [resolvable:$true] %s726
      %729 = dma.vmem_to_hbm [thread:$0]  %s727, 128, %s15, [#allocation4]
    $region101: #{tpu_custom_call.1} parent=1 // pred_fallthru
      _
    // Predicated region
    $region102: #{tpu_custom_call.1} parent=1 // pred_check
      _
    $region103: #{tpu_custom_call.1} parent=1 // pred_check_branch
      %731 = sbr.rel (0) target = $region105
    $region104: #{tpu_custom_call.1} parent=1 // pred_region
      %732 = dma.done [#allocation4], 128
    $region105: #{tpu_custom_call.1} parent=1 // pred_fallthru
      _
    %733 = vsyncpa [#allocation3], 1
    %734 = vsyncpa [#allocation6], 1
    %735 = vsyncpa [#allocation9], 1
    %736 = vsyncpa [#allocation12], 1
    %737 = vsyncpa [#allocation15], 1
    %738 = vsyncpa [#allocation4], 1

</llo_original>
